<compile_context>
chip_gen: v7x
topology: tpu7x:2x2x1
jax: 0.10.0
libtpu: 0.0.40
codegen_flags: <defaults>
</compile_context>

<pallas_src>
import jax
import jax.numpy as jnp
from jax.experimental import pallas as pl
from jax.experimental.pallas import tpu as pltpu


_LANE = 128
# 512*128 lanes -> (2+1)*tile*4B*2(double-buffer) = 1.5 MiB of VMEM: fits the
# default scoped-VMEM limit on v5e/v6e/v7x, no vmem_limit_bytes override needed.
_MAX_TILE_LANES = 512 * _LANE
_MIN_PALLAS_BATCH = 128  # below this, a fused XLA graph beats kernel overhead


def _round_up(n, m):
    return ((n + m - 1) // m) * m


def _xor_mlp_kernel(params_ref, x_ref, o_ref):
    # params_ref : SMEM (9,) f32 = [w1_00, w1_01, w1_10, w1_11,
    #                               b1_0, b1_1, w2_00, w2_01, b2_0]
    # x_ref      : VMEM (2, T) f32  -- feature-major, batch on lanes
    # o_ref      : VMEM (1, T) f32  -- lane-dense output
    x0 = x_ref[0:1, :]  # (1, T)
    x1 = x_ref[1:2, :]  # (1, T)

    w1_00 = params_ref[0]
    w1_01 = params_ref[1]
    w1_10 = params_ref[2]
    w1_11 = params_ref[3]
    b1_0 = params_ref[4]
    b1_1 = params_ref[5]
    w2_0 = params_ref[6]
    w2_1 = params_ref[7]
    b2_0 = params_ref[8]

    # Hidden layer as VPU FMAs with scalar (SMEM) weights; matches x @ W1.T + b1.
    h0 = w1_00 * x0 + w1_01 * x1 + b1_0
    h1 = w1_10 * x0 + w1_11 * x1 + b1_1

    # Sigmoid: exp + reciprocal hit the EUP slot (VALU stays free for the FMAs).
    # (pl.reciprocal(..., approx=True) is a further option if ~1e-4 rel error is OK.)
    s0 = jax.nn.sigmoid(h0)
    s1 = jax.nn.sigmoid(h1)

    # Output layer: Linear(2 -> 1) as two more FMAs.
    o_ref[...] = w2_0 * s0 + w2_1 * s1 + b2_0


def _xor_pallas(x, w1, b1, w2, b2):
    B = x.shape[0]
    tile = min(_MAX_TILE_LANES, _round_up(B, _LANE))
    b_padded = _round_up(B, tile)

    # Layout plumbing in plain JAX: feature-major (2, B), pad batch to tile.
    xt = jnp.transpose(x).astype(jnp.float32)  # (2, B)
    if b_padded != B:
        xt = jnp.pad(xt, ((0, 0), (0, b_padded - B)))

    # Flatten all parameters into one small SMEM-resident vector.
    params = jnp.concatenate(
        [jnp.ravel(w1), jnp.ravel(b1), jnp.ravel(w2), jnp.ravel(b2)]
    ).astype(jnp.float32)  # (9,)

    grid = (b_padded // tile,)
    out = pl.pallas_call(
        _xor_mlp_kernel,
        out_shape=jax.ShapeDtypeStruct((1, b_padded), jnp.float32),
        grid=grid,
        in_specs=[
            pl.BlockSpec(memory_space=pltpu.MemorySpace.SMEM),  # params (whole)
            pl.BlockSpec((2, tile), lambda i: (0, i)),          # x, lane-dense
        ],
        out_specs=pl.BlockSpec((1, tile), lambda i: (0, i)),    # lane-dense out
        compiler_params=pltpu.CompilerParams(
            dimension_semantics=("parallel",),  # shard batch tiles across TCs (v7x)
        ),
    )(params, xt)

    return jnp.transpose(out[:, :B])  # (B, 1), drop padded batch rows


def _reference_forward(x, w1, b1, w2, b2):
    h = jax.nn.sigmoid(x @ w1.T + b1)
    return h @ w2.T + b2


def xor_nonlinear_forward(x, w1, b1, w2, b2, *, min_pallas_batch=_MIN_PALLAS_BATCH):
    """Forward pass of XORNonLinear.

    Args:
      x : (B, 2) float32
      w1: (2, 2) float32  -- PyTorch layout (out_features, in_features)
      b1: (2,)   float32
      w2: (1, 2) float32  -- PyTorch layout (out_features, in_features)
      b2: (1,)   float32
    Returns:
      (B, 1) float32
    """
    B = x.shape[0]
    if B < min_pallas_batch:
        # Tiny batch: kernel-call overhead dominates; let XLA fuse the MLP.
        return _reference_forward(x, w1, b1, w2, b2)
    return _xor_pallas(x, w1, b1, w2, b2)


if __name__ == "__main__":
    key = jax.random.PRNGKey(0)
    k_x, k_w1, k_b1, k_w2, k_b2 = jax.random.split(key, 5)

    # Deterministic parameter init mimicking PyTorch's uniform(-1/sqrt(fan_in), +)
    bound = 1.0 / jnp.sqrt(2.0)
    w1 = jax.random.uniform(k_w1, (2, 2), jnp.float32, -bound, bound)
    b1 = jax.random.uniform(k_b1, (2,), jnp.float32, -bound, bound)
    w2 = jax.random.uniform(k_w2, (1, 2), jnp.float32, -bound, bound)
    b2 = jax.random.uniform(k_b2, (1,), jnp.float32, -bound, bound)

    # --- Pallas path (lane-dense batch, one tile) ---
    B = 256
    x = jax.random.normal(k_x, (B, 2), dtype=jnp.float32)
    out = xor_nonlinear_forward(x, w1, b1, w2, b2)
    out = jax.block_until_ready(out)
    ref = _reference_forward(x, w1, b1, w2, b2)
    assert out.shape == (B, 1), out.shape
    assert jnp.allclose(out, ref, atol=1e-5, rtol=1e-5), "mismatch vs reference (B=256)"

    # --- Pallas path with ragged batch (exercises wrapper-side padding) ---
    B2 = 200
    x2 = jax.random.normal(jax.random.PRNGKey(1), (B2, 2), dtype=jnp.float32)
    out2 = xor_nonlinear_forward(x2, w1, b1, w2, b2, min_pallas_batch=1)
    out2 = jax.block_until_ready(out2)
    ref2 = _reference_forward(x2, w1, b1, w2, b2)
    assert out2.shape == (B2, 1), out2.shape
    assert jnp.allclose(out2, ref2, atol=1e-5, rtol=1e-5), "mismatch vs reference (B=200)"

    # --- Tiny-batch fallback (fused XLA, no kernel) ---
    B3 = 8
    x3 = jax.random.normal(jax.random.PRNGKey(2), (B3, 2), dtype=jnp.float32)
    out3 = jax.block_until_ready(xor_nonlinear_forward(x3, w1, b1, w2, b2))
    ref3 = _reference_forward(x3, w1, b1, w2, b2)
    assert out3.shape == (B3, 1), out3.shape
    assert jnp.allclose(out3, ref3, atol=1e-5, rtol=1e-5), "mismatch vs reference (B=8)"

    print("KERNEL_OK")
</pallas_src>

<mosaic_0001>
module attributes {stable_mosaic.version = 11 : i64} {
  func.func @_xor_mlp_kernel(%arg0: i32, %arg1: memref<9xf32, #tpu.memory_space<smem>>, %arg2: memref<2x256xf32, #tpu.memory_space<vmem>>, %arg3: memref<1x256xf32, #tpu.memory_space<vmem>>) attributes {dimension_semantics = [#tpu.dimension_semantics<parallel>], iteration_bounds = array<i64: 1>, scalar_prefetch = 0 : i64, scratch_operands = 0 : i64, tpu.core_type = #tpu.core_type<tc>, window_params = [{transform_indices = @transform_0, window_bounds = array<i64: 9>}, {transform_indices = @transform_1, window_bounds = array<i64: 2, 256>}, {transform_indices = @transform_2, window_bounds = array<i64: 1, 256>}]} {
    %c0 = arith.constant 0 : index
    %c0_0 = arith.constant 0 : index
    %0 = vector.load %arg2[%c0, %c0_0] : memref<2x256xf32, #tpu.memory_space<vmem>>, vector<1x256xf32>
    %c1 = arith.constant 1 : index
    %c0_1 = arith.constant 0 : index
    %1 = vector.load %arg2[%c1, %c0_1] : memref<2x256xf32, #tpu.memory_space<vmem>>, vector<1x256xf32>
    %c0_2 = arith.constant 0 : index
    %2 = memref.load %arg1[%c0_2] : memref<9xf32, #tpu.memory_space<smem>>
    %c1_3 = arith.constant 1 : index
    %3 = memref.load %arg1[%c1_3] : memref<9xf32, #tpu.memory_space<smem>>
    %c2 = arith.constant 2 : index
    %4 = memref.load %arg1[%c2] : memref<9xf32, #tpu.memory_space<smem>>
    %c3 = arith.constant 3 : index
    %5 = memref.load %arg1[%c3] : memref<9xf32, #tpu.memory_space<smem>>
    %c4 = arith.constant 4 : index
    %6 = memref.load %arg1[%c4] : memref<9xf32, #tpu.memory_space<smem>>
    %c5 = arith.constant 5 : index
    %7 = memref.load %arg1[%c5] : memref<9xf32, #tpu.memory_space<smem>>
    %c6 = arith.constant 6 : index
    %8 = memref.load %arg1[%c6] : memref<9xf32, #tpu.memory_space<smem>>
    %c7 = arith.constant 7 : index
    %9 = memref.load %arg1[%c7] : memref<9xf32, #tpu.memory_space<smem>>
    %c8 = arith.constant 8 : index
    %10 = memref.load %arg1[%c8] : memref<9xf32, #tpu.memory_space<smem>>
    %11 = vector.broadcast %2 : f32 to vector<1x256xf32>
    %12 = arith.mulf %11, %0 : vector<1x256xf32>
    %13 = vector.broadcast %3 : f32 to vector<1x256xf32>
    %14 = arith.mulf %13, %1 : vector<1x256xf32>
    %15 = arith.addf %12, %14 : vector<1x256xf32>
    %16 = vector.broadcast %6 : f32 to vector<1x256xf32>
    %17 = arith.addf %15, %16 : vector<1x256xf32>
    %18 = vector.broadcast %4 : f32 to vector<1x256xf32>
    %19 = arith.mulf %18, %0 : vector<1x256xf32>
    %20 = vector.broadcast %5 : f32 to vector<1x256xf32>
    %21 = arith.mulf %20, %1 : vector<1x256xf32>
    %22 = arith.addf %19, %21 : vector<1x256xf32>
    %23 = vector.broadcast %7 : f32 to vector<1x256xf32>
    %24 = arith.addf %22, %23 : vector<1x256xf32>
    %25 = arith.negf %17 : vector<1x256xf32>
    %26 = math.exp %25 : vector<1x256xf32>
    %cst = arith.constant 1.000000e+00 : f32
    %27 = vector.broadcast %cst : f32 to vector<1x256xf32>
    %28 = arith.addf %27, %26 : vector<1x256xf32>
    %29 = arith.divf %27, %28 : vector<1x256xf32>
    %30 = arith.negf %24 : vector<1x256xf32>
    %31 = math.exp %30 : vector<1x256xf32>
    %cst_4 = arith.constant 1.000000e+00 : f32
    %32 = vector.broadcast %cst_4 : f32 to vector<1x256xf32>
    %33 = arith.addf %32, %31 : vector<1x256xf32>
    %34 = arith.divf %32, %33 : vector<1x256xf32>
    %35 = vector.broadcast %8 : f32 to vector<1x256xf32>
    %36 = arith.mulf %35, %29 : vector<1x256xf32>
    %37 = vector.broadcast %9 : f32 to vector<1x256xf32>
    %38 = arith.mulf %37, %34 : vector<1x256xf32>
    %39 = arith.addf %36, %38 : vector<1x256xf32>
    %40 = vector.broadcast %10 : f32 to vector<1x256xf32>
    %41 = arith.addf %39, %40 : vector<1x256xf32>
    %c0_5 = arith.constant 0 : index
    %c0_6 = arith.constant 0 : index
    %42 = vector.load %arg3[%c0_5, %c0_6] : memref<1x256xf32, #tpu.memory_space<vmem>>, vector<1x256xf32>
    tpu.vector_store %arg3[%c0_5, %c0_6], %41 {strides = array<i32>} : memref<1x256xf32, #tpu.memory_space<vmem>>, vector<1x256xf32>,
    return
  }
  func.func @transform_0(%arg0: i32) -> i32 {
    %c0_i32 = arith.constant 0 : i32
    %c0_i32_0 = arith.constant 0 : i32
    return %c0_i32 : i32
  }
  func.func @transform_1(%arg0: i32) -> (i32, i32) {
    %c0_i32 = arith.constant 0 : i32
    %c0_i32_0 = arith.constant 0 : i32
    return %c0_i32, %arg0 : i32, i32
  }
  func.func @transform_2(%arg0: i32) -> (i32, i32) {
    %c0_i32 = arith.constant 0 : i32
    %c0_i32_0 = arith.constant 0 : i32
    return %c0_i32, %arg0 : i32, i32
  }
}

</mosaic_0001>

<llo_original>
// kernel: tpu_custom_call.1
$region0: #{tpu_custom_call.1}
  #allocation0 [shape = 'u32[]', space=smem, size = 0x4, offset = 0x4, fixed_abs, tag = 'smem constant byte address 0x4 - core index']
  #allocation1 [shape = 'u32[144,128]{1,0:T(1,128)}', space=vmem, size = 0x12000, scoped, tag = 'internal scratch']
  %s0 = inlined_call_operand.hbm [shape: f32[9], index: 0, kind: input, shape index: {}]
  %s1 = inlined_call_operand.hbm [shape: f32[2,256], index: 1, kind: input, shape index: {}]
  %s2 = inlined_call_operand.hbm [shape: f32[1,256], index: 2, kind: output, shape index: {}]
  %s3 = sld [smem:[#allocation0]]
  $region26: #{tpu_custom_call.1} parent=0
    _
  %s5 = ssub.s32 1, %s3
  %s6 = scalar_select 0, %s5, %s3
  $region1: #{tpu_custom_call.1} parent=0
    #allocation2 [shape = 'u8[512]{0}', space=smem, size = 0x200, scoped, tag = 'input window, operand 0, single buffered']
    #allocation3 [shape = 's32[1]{0}', space=sflag, size = 0x4, scoped, tag = 'scoped memory for tpu_custom_call.1']
    #allocation4 [shape = 's32[1]{0}', space=sflag, size = 0x4, scoped, tag = 'scoped memory for tpu_custom_call.1']
    #allocation5 [shape = 's32[1]{0}', space=sflag, size = 0x4, scoped, tag = 'scoped memory for tpu_custom_call.1']
    #allocation6 [shape = 'u8[2048]{0}', space=vmem, size = 0x800, scoped, tag = 'input window, operand 1, single buffered']
    #allocation7 [shape = 'u8[1024]{0}', space=vmem, size = 0x400, scoped, tag = 'output window, operand 0, single buffered']
    %7 = vsyncpa [#allocation5], 0
    %8 = vsyncpa [#allocation3], 0
    %9 = vsyncpa [#allocation4], 0
    // Predicated region
    $region2: #{tpu_custom_call.1} parent=1 // pred_check
      _
    $region3: #{tpu_custom_call.1} parent=1 // pred_check_branch
      %11 = sbr.rel (0) target = $region5
    $region4: #{tpu_custom_call.1} parent=1 // pred_region
      %s13 = ssub.s32 16, 16
      %14 = vsyncadd [#allocation5], %s13
      %17 = dma.hbm_to_smem %s0, 16, [#allocation2], [#allocation5]
    $region5: #{tpu_custom_call.1} parent=1 // pred_fallthru
      _
    // Predicated region
    $region6: #{tpu_custom_call.1} parent=1 // pred_check
      _
    $region7: #{tpu_custom_call.1} parent=1 // pred_check_branch
      %19 = sbr.rel (0) target = $region9
    $region8: #{tpu_custom_call.1} parent=1 // pred_region
      %s21 = ssub.s32 64, 64
      %22 = vsyncadd [#allocation3], %s21
      %s24 = sshll.u32 [#allocation6], 4
      %s25 = int_to_ptr.vmem [resolvable:$true] %s24
      %27 = dma.hbm_to_vmem [thread:$0]  %s1, 64, %s25, [#allocation3]
    $region9: #{tpu_custom_call.1} parent=1 // pred_fallthru
      _
    // Predicated region
    $region10: #{tpu_custom_call.1} parent=1 // pred_check
      _
    $region11: #{tpu_custom_call.1} parent=1 // pred_check_branch
      %29 = sbr.rel (0) target = $region13
    $region12: #{tpu_custom_call.1} parent=1 // pred_region
      %30 = dma.done [#allocation5], 16
    $region13: #{tpu_custom_call.1} parent=1 // pred_fallthru
      _
    // Predicated region
    $region14: #{tpu_custom_call.1} parent=1 // pred_check
      _
    $region15: #{tpu_custom_call.1} parent=1 // pred_check_branch
      %32 = sbr.rel (0) target = $region17
    $region16: #{tpu_custom_call.1} parent=1 // pred_region
      %33 = dma.done [#allocation3], 64
    $region17: #{tpu_custom_call.1} parent=1 // pred_fallthru
      _
    %34 = sfence
    %v35 = vld [vmem:[#allocation6] ss:$2 sm:$0x3]
    %s36 = scalar_lea.vmem [#allocation6], 1
    %v37 = vld [vmem:[%s36] ss:$2 sm:$0x3]
    %s38 = sld [smem:[#allocation2]]
    %s39 = sld [smem:[#allocation2 + $0x1]]
    %s40 = sld [smem:[#allocation2 + $0x2]]
    %s41 = sld [smem:[#allocation2 + $0x3]]
    %s42 = sld [smem:[#allocation2 + $0x4]]
    %s43 = sld [smem:[#allocation2 + $0x5]]
    %s44 = sld [smem:[#allocation2 + $0x6]]
    %s45 = sld [smem:[#allocation2 + $0x7]]
    %s46 = sld [smem:[#allocation2 + $0x8]]
    %v47 = vstv %s38
    %v48 = vmul.f32 %v47, %v35
    %v49 = vstv %s39
    %v50 = vmul.f32 %v49, %v37
    %v51 = vadd.f32 %v48, %v50
    %v52 = vstv %s42
    %v53 = vadd.f32 %v51, %v52
    %v54 = vstv %s40
    %v55 = vmul.f32 %v54, %v35
    %v56 = vstv %s41
    %v57 = vmul.f32 %v56, %v37
    %v58 = vadd.f32 %v55, %v57
    %v59 = vstv %s43
    %v60 = vadd.f32 %v58, %v59
    %v61 = vxor.u32 %v53, 2147483648
    %v62 = vmul.f32 %v61, 1.442695
    %v63 = vpow.pop %v62
    %v64 = vadd.f32 %v63, 1.0
    %v65 = vrcp.pop %v64
    %v66 = vmul.f32 1.0, %v65
    %v67 = vxor.u32 %v60, 2147483648
    %v68 = vmul.f32 %v67, 1.442695
    %v69 = vpow.pop %v68
    %v70 = vadd.f32 %v69, 1.0
    %v71 = vrcp.pop %v70
    %v72 = vmul.f32 1.0, %v71
    %v73 = vstv %s44
    %v74 = vmul.f32 %v73, %v66
    %v75 = vstv %s45
    %v76 = vmul.f32 %v75, %v72
    %v77 = vadd.f32 %v74, %v76
    %v78 = vstv %s46
    %v79 = vadd.f32 %v77, %v78
    %v80 = vlaneseq
    %vm81 = vcmp.ge.s32.totalorder %v80, 0
    %vm82 = vcmp.lt.s32.totalorder %v80, 256
    %vm83 = vmand %vm81, %vm82
    %84 = vst.msk [vmem:[#allocation7] sm:$0x3] %vm83, %v79
    // Predicated region
    $region18: #{tpu_custom_call.1} parent=1 // pred_check
      _
    $region19: #{tpu_custom_call.1} parent=1 // pred_check_branch
      %86 = sbr.rel (0) target = $region21
    $region20: #{tpu_custom_call.1} parent=1 // pred_region
      %s88 = ssub.s32 32, 32
      %89 = vsyncadd [#allocation4], %s88
      %s91 = sshll.u32 [#allocation7], 4
      %s92 = int_to_ptr.vmem [resolvable:$true] %s91
      %94 = dma.vmem_to_hbm [thread:$0]  %s92, 32, %s2, [#allocation4]
    $region21: #{tpu_custom_call.1} parent=1 // pred_fallthru
      _
    // Predicated region
    $region22: #{tpu_custom_call.1} parent=1 // pred_check
      _
    $region23: #{tpu_custom_call.1} parent=1 // pred_check_branch
      %96 = sbr.rel (0) target = $region25
    $region24: #{tpu_custom_call.1} parent=1 // pred_region
      %97 = dma.done [#allocation4], 32
    $region25: #{tpu_custom_call.1} parent=1 // pred_fallthru
      _
    %98 = vsyncpa [#allocation3], 1
    %99 = vsyncpa [#allocation4], 1
    %100 = vsyncpa [#allocation5], 1

</llo_original>
